<compile_context>
chip_gen: v7x
topology: tpu7x:2x2x1
jax: 0.10.0
libtpu: 0.0.40
codegen_flags: <defaults>
</compile_context>

<pallas_src>
import functools

import jax
import jax.numpy as jnp
from jax.experimental import pallas as pl
from jax.experimental.pallas import tpu as pltpu


def _round_up(x, m):
    return (x + m - 1) // m * m


def _tensorcores_per_chip():
    """Best-effort TC-per-chip sniff (v4/v5p/v7x have 2; v5e/v6e have 1)."""
    try:
        kind = jax.devices()[0].device_kind.lower()
    except Exception:
        return 1
    if "v7" in kind or "v4" in kind or "v5p" in kind:
        return 2
    return 1


# ---------------------------------------------------------------------------
# Fused kernel: biaffine scores + boundary vector + midfeas heads + segment mask,
# batched over a (bt, L, D) tile with no per-item loop.
# ---------------------------------------------------------------------------
def _biaffine_fused_kernel(f_ref, c_ref, b_ref, wpack_ref, sel_ref, uxt_ref,
                           uyt_ref, uc_ref, we_ref, be_ref, triu_ref, slab_ref):
    bt, L, D = f_ref.shape
    C = uc_ref.shape[-1]
    SW = slab_ref.shape[-1]
    M = bt * L
    f32 = jnp.float32
    bf16 = jnp.bfloat16

    # f = f + c, b = b + c; shift b up one position so row (b, i) pairs f[b, i] with
    # b[b, i+1].  Row L-1 of each item is a junk cross-pair and is masked out below.
    fs = f_ref[...] + c_ref[...]                                     # (bt, L, D)
    bs = b_ref[...] + c_ref[...]                                     # (bt, L, D)
    bsh = jnp.concatenate([bs[:, 1:, :], bs[:, :1, :]], axis=1)      # (bt, L, D)

    fa = fs.reshape(M, D)
    ba = bsh.reshape(M, D)
    fa_h = fa.astype(bf16)
    ba_h = ba.astype(bf16)

    # --- biaffine scores for the whole batch tile in one packed pass ---------------
    #   t = fa @ W_pack (per-class blocks along lanes); the grouped per-class reduce
    #   and both bias terms are three more MXU matmuls (no 160-wide lhs concat, no
    #   per-class loop, no per-item loop).
    t = jnp.dot(fa_h, wpack_ref[...], preferred_element_type=f32)    # (M, C*D) f32
    prod = t * jnp.tile(ba, (1, C))                                  # (M, C*D) f32
    asw2d = (jnp.dot(prod.astype(bf16), sel_ref[...], preferred_element_type=f32)
             + jnp.dot(fa_h, uxt_ref[...], preferred_element_type=f32)
             + jnp.dot(ba_h, uyt_ref[...], preferred_element_type=f32)
             + uc_ref[...])                                          # (M, C) f32
    asw3d = asw2d.reshape(bt, L, C)

    # Zero the junk row L-1; this *is* torch's asw1 = cat([asw, zeros(B,1,3)], -2).
    row = jax.lax.broadcasted_iota(jnp.int32, (bt, L, C), 1)
    aswp = jnp.where(row < L - 1, asw3d, 0.0)                        # (bt, L, C)
    asw_prev = jnp.concatenate(                                      # asw2 = [0 ; asw]
        [jnp.zeros((bt, 1, C), f32), asw3d[:, :L - 1, :]], axis=1)   # (bt, L, C)

    # --- midfeas: all three Linear(6, D) heads packed along lanes -> one matmul ----
    asw3 = jnp.concatenate([aswp, asw_prev], axis=-1)                # (bt, L, 2C)
    al2d = (jnp.dot(asw3.reshape(M, 2 * C), we_ref[...], preferred_element_type=f32)
            + be_ref[...])                                           # (M, 3D)
    al3d = al2d.reshape(bt, L, 3 * D)

    # --- segwords: boundary = (argmax(asw) == 2), with an always-true slot prepended.
    # Strict '>' reproduces first-occurrence argmax tie behaviour.
    a0 = asw3d[:, :, 0:1]
    a1 = asw3d[:, :, 1:2]
    a2 = asw3d[:, :, 2:3]
    is2 = jnp.logical_and(a2 > a0, a2 > a1).astype(f32)              # (bt, L, 1)
    e = jnp.concatenate([jnp.ones((bt, 1, 1), f32), is2[:, :L - 1, :]], axis=1)
    # cum[b, j] = #boundaries at positions <= j.  These are exact small integers, so
    # the f32 matmul and equality below are exact (do NOT cast this path to bf16).
    cum = jnp.dot(e.reshape(bt, L), triu_ref[...],
                  preferred_element_type=f32)                        # (bt, L)
    maskf = (cum.reshape(bt, L, 1) == cum.reshape(bt, 1, L)).astype(f32)  # (bt, L, L)

    # --- one lane-dense store:  [ al1|al2|al3 | asw(+zero row) | mask | pad ] -------
    pieces = [al3d, aswp, maskf]
    pad = SW - (3 * D + C + L)
    if pad:
        pieces.append(jnp.zeros((bt, L, pad), f32))
    slab_ref[...] = jnp.concatenate(pieces, axis=-1)


def _pick_block_b(B, L, D, C, slab_w, vmem_budget_bytes=40 << 20, min_grid_steps=1):
    """Largest batch tile that divides B, fits the VMEM budget (incl. the
    double-buffered weight blocks) and leaves >= min_grid_steps grid steps."""
    # Per-item bytes: 2x-buffered f/c/b input blocks + slab output block + the main
    # f32 intermediates (t / ba_rep / prod at C*D lanes, al, mask, slab assembly).
    per_item = 4 * L * (2 * (3 * D + slab_w)
                        + 3 * C * D + 6 * D + 2 * L + slab_w)
    # Grid-invariant weight blocks (double-buffered by the pipeline).
    # TODO(synk): mark the weight in_specs pipeline_mode=pl.Buffered(1) on v7x to
    # halve this footprint at large D.
    weight_bytes = 2 * (2 * (D * C * D + C * D * C + 2 * D * C)          # bf16
                        + 4 * (C + 2 * C * 3 * D + 3 * D + L * L))       # f32
    avail = max(vmem_budget_bytes - weight_bytes, per_item)
    bt = max(1, min(B // max(min_grid_steps, 1), avail // max(per_item, 1)))
    bt = min(bt, B)
    while B % bt:
        bt -= 1
    return bt


# ---------------------------------------------------------------------------
# Parameters (packing hoisted out of the forward pass).
# ---------------------------------------------------------------------------
def init_params(key, dim=32, classdim=3):
    ks = jax.random.split(key, 7)
    U = jax.random.normal(ks[0], (classdim, dim + 1, dim + 1), jnp.float32) * 0.1
    # nn.Linear(6, dim): y = x @ W.T + b; weights stored pre-transposed as (6, dim).
    w_embed = jax.random.normal(ks[1], (6, dim), jnp.float32) * 0.1
    w_embed2 = jax.random.normal(ks[2], (6, dim), jnp.float32) * 0.1
    w_embed3 = jax.random.normal(ks[3], (6, dim), jnp.float32) * 0.1
    b_embed = jax.random.normal(ks[4], (dim,), jnp.float32) * 0.1
    b_embed2 = jax.random.normal(ks[5], (dim,), jnp.float32) * 0.1
    b_embed3 = jax.random.normal(ks[6], (dim,), jnp.float32) * 0.1
    return {"U": U,
            "w_embed": w_embed, "w_embed2": w_embed2, "w_embed3": w_embed3,
            "b_embed": b_embed, "b_embed2": b_embed2, "b_embed3": b_embed3}


def prepare_params(raw):
    """One-time repack of the weights into the kernel's packed layouts."""
    U = raw["U"]
    C, Dp1, _ = U.shape
    D = Dp1 - 1
    assert C == 3, "classdim must be 3 (forward concatenates with zeros(B,1,3))"
    # W_pack[f, k*D+g] = U[k, f, g]
    w_pack = jnp.transpose(U[:, :D, :D], (1, 0, 2)).reshape(D, C * D)
    uxT = jnp.transpose(U[:, :D, D])             # (D, C): U[k, f, D]
    uyT = jnp.transpose(U[:, D, :D])             # (D, C): U[k, D, g]
    uc_row = U[:, D, D][None, :]                 # (1, C): U[k, D, D]
    # Block selector: sel[k*D+g, k'] = 1{k == k'} (grouped reduce via the MXU).
    sel = (jnp.arange(C * D)[:, None] // D == jnp.arange(C)[None, :]).astype(jnp.float32)
    # forward returns al1=embed(asw3), al2=embed3(asw3), al3=embed2(asw3).
    w_embed_pack = jnp.concatenate(
        [raw["w_embed"], raw["w_embed3"], raw["w_embed2"]], axis=-1)      # (6, 3D)
    b_embed_pack = jnp.concatenate(
        [raw["b_embed"], raw["b_embed3"], raw["b_embed2"]])[None, :]      # (1, 3D)
    return {"w_pack": w_pack.astype(jnp.bfloat16),
            "sel": sel.astype(jnp.bfloat16),
            "uxT": uxT.astype(jnp.bfloat16),
            "uyT": uyT.astype(jnp.bfloat16),
            "uc_row": uc_row.astype(jnp.float32),
            "w_embed_pack": w_embed_pack.astype(jnp.float32),
            "b_embed_pack": b_embed_pack.astype(jnp.float32),
            "dim": int(D), "classdim": int(C)}


# ---------------------------------------------------------------------------
# Full forward (gate=False, segwords=True, midfeas=True; dropout inactive).
# ---------------------------------------------------------------------------
def biaffine_score_layer_forward(params, f, c, b, mask=None):
    # TODO(synk): masked_fill paths for a non-None `mask` are not implemented;
    # this forward assumes mask=None (the default PyTorch call path).
    B, L, D = f.shape
    C = params["classdim"]
    slab_w = _round_up(3 * D + C + L, 128)
    # TODO(synk): for large L (>=128) emit the segment mask as a separate lane-aligned
    # int8 output instead of folding it (f32) into the slab.
    bt = _pick_block_b(B, L, D, C, slab_w, min_grid_steps=_tensorcores_per_chip())

    # Grid-invariant constant: triu[k, j] = 1{k <= j} (cumulative-count matmul).
    triu = jnp.triu(jnp.ones((L, L), jnp.float32))

    slab = pl.pallas_call(
        _biaffine_fused_kernel,
        out_shape=jax.ShapeDtypeStruct((B, L, slab_w), jnp.float32),
        grid=(B // bt,),
        in_specs=[
            pl.BlockSpec((bt, L, D), lambda i: (i, 0, 0)),        # f
            pl.BlockSpec((bt, L, D), lambda i: (i, 0, 0)),        # c
            pl.BlockSpec((bt, L, D), lambda i: (i, 0, 0)),        # b
            pl.BlockSpec((D, C * D), lambda i: (0, 0)),           # W_pack   (bf16)
            pl.BlockSpec((C * D, C), lambda i: (0, 0)),           # sel      (bf16)
            pl.BlockSpec((D, C), lambda i: (0, 0)),               # UX^T     (bf16)
            pl.BlockSpec((D, C), lambda i: (0, 0)),               # UY^T     (bf16)
            pl.BlockSpec((1, C), lambda i: (0, 0)),               # uc       (f32)
            pl.BlockSpec((2 * C, 3 * D), lambda i: (0, 0)),       # embed W  (f32)
            pl.BlockSpec((1, 3 * D), lambda i: (0, 0)),           # embed b  (f32)
            pl.BlockSpec((L, L), lambda i: (0, 0)),               # triu     (f32)
        ],
        out_specs=pl.BlockSpec((bt, L, slab_w), lambda i: (i, 0, 0)),
        compiler_params=pltpu.CompilerParams(
            dimension_semantics=("parallel",),
            vmem_limit_bytes=48 * 1024 * 1024),
    )(f, c, b, params["w_pack"], params["sel"], params["uxT"], params["uyT"],
      params["uc_row"], params["w_embed_pack"], params["b_embed_pack"], triu)

    # Unpack the lane-dense slab.
    al = slab[:, :, :3 * D]
    asw = slab[:, :L - 1, 3 * D:3 * D + C]
    masks = slab[:, :, 3 * D + C:3 * D + C + L] > 0.5        # torch returns bool
    al1 = al[:, :, :D]
    al2 = al[:, :, D:2 * D]
    al3 = al[:, :, 2 * D:3 * D]
    return asw, masks, al1, al2, al3


if __name__ == "__main__":
    key = jax.random.PRNGKey(0)
    kf, kc, kb, kp = jax.random.split(key, 4)
    B, L, D, C = 2, 8, 32, 3
    f = jax.random.normal(kf, (B, L, D), jnp.float32)
    c = jax.random.normal(kc, (B, L, D), jnp.float32)
    b = jax.random.normal(kb, (B, L, D), jnp.float32)
    raw = init_params(kp, dim=D, classdim=C)
    params = prepare_params(raw)

    fwd = jax.jit(functools.partial(biaffine_score_layer_forward, params))
    asw, masks, al1, al2, al3 = jax.block_until_ready(fwd(f, c, b))

    # ---- pure-JAX reference for the biaffine hot path (augmented bilinear form) ----
    hp = jax.lax.Precision.HIGHEST
    ones = jnp.ones((B, L - 1, 1), jnp.float32)
    fa_r = jnp.concatenate([(f + c)[:, :-1, :], ones], axis=-1)
    ba_r = jnp.concatenate([(b + c)[:, 1:, :], ones], axis=-1)
    asw_ref = jnp.einsum("bif,cfg,big->bic", fa_r, raw["U"], ba_r, precision=hp)
    scale = float(jnp.max(jnp.abs(asw_ref)))
    # bf16 MXU operands/weights vs HIGHEST f32 reference -> relative-to-scale bound.
    assert asw.shape == (B, L - 1, C)
    assert float(jnp.max(jnp.abs(asw - asw_ref))) <= 4e-2 * scale + 1e-4

    # ---- mask / embed references built from the kernel's own asw: checks the fused
    # argmax / shift / cumulative-count / linear logic exactly, independent of matmul
    # rounding (argmax ties handled identically: strict '>' == first-occurrence max).
    score = jnp.argmax(asw, axis=2)
    e = jnp.concatenate([jnp.ones((B, 1), jnp.float32),
                         (score == 2).astype(jnp.float32)], axis=1)      # (B, L)
    cum = jnp.cumsum(e, axis=1)
    masks_ref = cum[:, :, None] == cum[:, None, :]
    assert masks.shape == (B, L, L) and masks.dtype == jnp.bool_
    assert bool(jnp.array_equal(masks, masks_ref))

    addz = jnp.zeros((B, 1, C), jnp.float32)
    asw3 = jnp.concatenate([jnp.concatenate([asw, addz], axis=1),
                            jnp.concatenate([addz, asw], axis=1)], axis=-1)  # (B, L, 6)
    al1_ref = jnp.einsum("blf,fd->bld", asw3, raw["w_embed"], precision=hp) + raw["b_embed"]
    al2_ref = jnp.einsum("blf,fd->bld", asw3, raw["w_embed3"], precision=hp) + raw["b_embed3"]
    al3_ref = jnp.einsum("blf,fd->bld", asw3, raw["w_embed2"], precision=hp) + raw["b_embed2"]
    for got, ref in ((al1, al1_ref), (al2, al2_ref), (al3, al3_ref)):
        assert got.shape == (B, L, D)
        s = float(jnp.max(jnp.abs(ref))) + 1e-6
        assert float(jnp.max(jnp.abs(got - ref))) <= 2e-2 * s

    print("KERNEL_OK")
</pallas_src>

<mosaic_0001>
module attributes {stable_mosaic.version = 11 : i64} {
  func.func @_biaffine_fused_kernel(%arg0: i32, %arg1: memref<2x8x32xf32, #tpu.memory_space<vmem>>, %arg2: memref<2x8x32xf32, #tpu.memory_space<vmem>>, %arg3: memref<2x8x32xf32, #tpu.memory_space<vmem>>, %arg4: memref<32x96xbf16, #tpu.memory_space<vmem>>, %arg5: memref<96x3xbf16, #tpu.memory_space<vmem>>, %arg6: memref<32x3xbf16, #tpu.memory_space<vmem>>, %arg7: memref<32x3xbf16, #tpu.memory_space<vmem>>, %arg8: memref<1x3xf32, #tpu.memory_space<vmem>>, %arg9: memref<6x96xf32, #tpu.memory_space<vmem>>, %arg10: memref<1x96xf32, #tpu.memory_space<vmem>>, %arg11: memref<8x8xf32, #tpu.memory_space<vmem>>, %arg12: memref<2x8x128xf32, #tpu.memory_space<vmem>>) attributes {dimension_semantics = [#tpu.dimension_semantics<parallel>], iteration_bounds = array<i64: 1>, scalar_prefetch = 0 : i64, scratch_operands = 0 : i64, tpu.core_type = #tpu.core_type<tc>, window_params = [{transform_indices = @transform_0, window_bounds = array<i64: 2, 8, 32>}, {transform_indices = @transform_1, window_bounds = array<i64: 2, 8, 32>}, {transform_indices = @transform_2, window_bounds = array<i64: 2, 8, 32>}, {pipeline_mode = #tpu.pipeline_mode<synchronous>, transform_indices = @transform_3, window_bounds = array<i64: 32, 96>}, {pipeline_mode = #tpu.pipeline_mode<synchronous>, transform_indices = @transform_4, window_bounds = array<i64: 96, 3>}, {pipeline_mode = #tpu.pipeline_mode<synchronous>, transform_indices = @transform_5, window_bounds = array<i64: 32, 3>}, {pipeline_mode = #tpu.pipeline_mode<synchronous>, transform_indices = @transform_6, window_bounds = array<i64: 32, 3>}, {pipeline_mode = #tpu.pipeline_mode<synchronous>, transform_indices = @transform_7, window_bounds = array<i64: 1, 3>}, {pipeline_mode = #tpu.pipeline_mode<synchronous>, transform_indices = @transform_8, window_bounds = array<i64: 6, 96>}, {pipeline_mode = #tpu.pipeline_mode<synchronous>, transform_indices = @transform_9, window_bounds = array<i64: 1, 96>}, {pipeline_mode = #tpu.pipeline_mode<synchronous>, transform_indices = @transform_10, window_bounds = array<i64: 8, 8>}, {transform_indices = @transform_11, window_bounds = array<i64: 2, 8, 128>}]} {
    %c0 = arith.constant 0 : index
    %c0_0 = arith.constant 0 : index
    %c0_1 = arith.constant 0 : index
    %0 = vector.load %arg1[%c0, %c0_0, %c0_1] : memref<2x8x32xf32, #tpu.memory_space<vmem>>, vector<2x8x32xf32>
    %c0_2 = arith.constant 0 : index
    %c0_3 = arith.constant 0 : index
    %c0_4 = arith.constant 0 : index
    %1 = vector.load %arg2[%c0_2, %c0_3, %c0_4] : memref<2x8x32xf32, #tpu.memory_space<vmem>>, vector<2x8x32xf32>
    %2 = arith.addf %0, %1 : vector<2x8x32xf32>
    %c0_5 = arith.constant 0 : index
    %c0_6 = arith.constant 0 : index
    %c0_7 = arith.constant 0 : index
    %3 = vector.load %arg3[%c0_5, %c0_6, %c0_7] : memref<2x8x32xf32, #tpu.memory_space<vmem>>, vector<2x8x32xf32>
    %c0_8 = arith.constant 0 : index
    %c0_9 = arith.constant 0 : index
    %c0_10 = arith.constant 0 : index
    %4 = vector.load %arg2[%c0_8, %c0_9, %c0_10] : memref<2x8x32xf32, #tpu.memory_space<vmem>>, vector<2x8x32xf32>
    %5 = arith.addf %3, %4 : vector<2x8x32xf32>
    %6 = vector.extract_strided_slice %5 {offsets = [0, 1, 0], sizes = [2, 7, 32], strides = [1, 1, 1]} : vector<2x8x32xf32> to vector<2x7x32xf32>
    %7 = vector.extract_strided_slice %5 {offsets = [0, 0, 0], sizes = [2, 1, 32], strides = [1, 1, 1]} : vector<2x8x32xf32> to vector<2x1x32xf32>
    %8 = tpu.concatenate %6, %7 in 1 : vector<2x7x32xf32>, vector<2x1x32xf32> -> vector<2x8x32xf32>
    %9 = vector.shape_cast %2 : vector<2x8x32xf32> to vector<16x32xf32>
    %10 = vector.shape_cast %8 : vector<2x8x32xf32> to vector<16x32xf32>
    %11 = arith.truncf %9 : vector<16x32xf32> to vector<16x32xbf16>
    %12 = arith.truncf %10 : vector<16x32xf32> to vector<16x32xbf16>
    %c0_11 = arith.constant 0 : index
    %c0_12 = arith.constant 0 : index
    %13 = vector.load %arg4[%c0_11, %c0_12] : memref<32x96xbf16, #tpu.memory_space<vmem>>, vector<32x96xbf16>
    %cst = arith.constant dense<0.000000e+00> : vector<16x96xf32>
    %14 = tpu.matmul %11, %13, %cst {dimension_numbers = #tpu.dot_dimension_numbers<[1], [0], [0], [1], [0, 0, 1, 1], [], []>} : vector<16x32xbf16>, vector<32x96xbf16>, vector<16x96xf32> -> vector<16x96xf32>
    %15 = tpu.concatenate %10, %10, %10 in 1 : vector<16x32xf32>, vector<16x32xf32>, vector<16x32xf32> -> vector<16x96xf32>
    %16 = arith.mulf %14, %15 : vector<16x96xf32>
    %17 = arith.truncf %16 : vector<16x96xf32> to vector<16x96xbf16>
    %c0_13 = arith.constant 0 : index
    %c0_14 = arith.constant 0 : index
    %18 = vector.load %arg5[%c0_13, %c0_14] : memref<96x3xbf16, #tpu.memory_space<vmem>>, vector<96x3xbf16>
    %cst_15 = arith.constant dense<0.000000e+00> : vector<16x3xf32>
    %19 = tpu.matmul %17, %18, %cst_15 {dimension_numbers = #tpu.dot_dimension_numbers<[1], [0], [0], [1], [0, 0, 1, 1], [], []>} : vector<16x96xbf16>, vector<96x3xbf16>, vector<16x3xf32> -> vector<16x3xf32>
    %c0_16 = arith.constant 0 : index
    %c0_17 = arith.constant 0 : index
    %20 = vector.load %arg6[%c0_16, %c0_17] : memref<32x3xbf16, #tpu.memory_space<vmem>>, vector<32x3xbf16>
    %cst_18 = arith.constant dense<0.000000e+00> : vector<16x3xf32>
    %21 = tpu.matmul %11, %20, %cst_18 {dimension_numbers = #tpu.dot_dimension_numbers<[1], [0], [0], [1], [0, 0, 1, 1], [], []>} : vector<16x32xbf16>, vector<32x3xbf16>, vector<16x3xf32> -> vector<16x3xf32>
    %22 = arith.addf %19, %21 : vector<16x3xf32>
    %c0_19 = arith.constant 0 : index
    %c0_20 = arith.constant 0 : index
    %23 = vector.load %arg7[%c0_19, %c0_20] : memref<32x3xbf16, #tpu.memory_space<vmem>>, vector<32x3xbf16>
    %cst_21 = arith.constant dense<0.000000e+00> : vector<16x3xf32>
    %24 = tpu.matmul %12, %23, %cst_21 {dimension_numbers = #tpu.dot_dimension_numbers<[1], [0], [0], [1], [0, 0, 1, 1], [], []>} : vector<16x32xbf16>, vector<32x3xbf16>, vector<16x3xf32> -> vector<16x3xf32>
    %25 = arith.addf %22, %24 : vector<16x3xf32>
    %c0_22 = arith.constant 0 : index
    %c0_23 = arith.constant 0 : index
    %26 = vector.load %arg8[%c0_22, %c0_23] : memref<1x3xf32, #tpu.memory_space<vmem>>, vector<1x3xf32>
    %27 = vector.broadcast %26 : vector<1x3xf32> to vector<16x3xf32>
    %28 = arith.addf %25, %27 : vector<16x3xf32>
    %29 = vector.shape_cast %28 : vector<16x3xf32> to vector<2x8x3xf32>
    %30 = tpu.iota {dimensions = array<i32: 1>} : vector<2x8x3xi32>
    %c7_i32 = arith.constant 7 : i32
    %31 = vector.broadcast %c7_i32 : i32 to vector<2x8x3xi32>
    %32 = arith.cmpi slt, %30, %31 : vector<2x8x3xi32>
    %cst_24 = arith.constant 0.000000e+00 : f32
    %33 = vector.broadcast %cst_24 : f32 to vector<2x8x3xf32>
    %34 = arith.select %32, %29, %33 : vector<2x8x3xi1>, vector<2x8x3xf32>
    %cst_25 = arith.constant 0.000000e+00 : f32
    %35 = vector.broadcast %cst_25 : f32 to vector<2x1x3xf32>
    %36 = vector.extract_strided_slice %29 {offsets = [0, 0, 0], sizes = [2, 7, 3], strides = [1, 1, 1]} : vector<2x8x3xf32> to vector<2x7x3xf32>
    %37 = tpu.concatenate %35, %36 in 1 : vector<2x1x3xf32>, vector<2x7x3xf32> -> vector<2x8x3xf32>
    %38 = tpu.concatenate %34, %37 in 2 : vector<2x8x3xf32>, vector<2x8x3xf32> -> vector<2x8x6xf32>
    %39 = vector.shape_cast %38 : vector<2x8x6xf32> to vector<16x6xf32>
    %c0_26 = arith.constant 0 : index
    %c0_27 = arith.constant 0 : index
    %40 = vector.load %arg9[%c0_26, %c0_27] : memref<6x96xf32, #tpu.memory_space<vmem>>, vector<6x96xf32>
    %cst_28 = arith.constant dense<0.000000e+00> : vector<16x96xf32>
    %41 = tpu.matmul %39, %40, %cst_28 {dimension_numbers = #tpu.dot_dimension_numbers<[1], [0], [0], [1], [0, 0, 1, 1], [], []>} : vector<16x6xf32>, vector<6x96xf32>, vector<16x96xf32> -> vector<16x96xf32>
    %c0_29 = arith.constant 0 : index
    %c0_30 = arith.constant 0 : index
    %42 = vector.load %arg10[%c0_29, %c0_30] : memref<1x96xf32, #tpu.memory_space<vmem>>, vector<1x96xf32>
    %43 = vector.broadcast %42 : vector<1x96xf32> to vector<16x96xf32>
    %44 = arith.addf %41, %43 : vector<16x96xf32>
    %45 = vector.shape_cast %44 : vector<16x96xf32> to vector<2x8x96xf32>
    %46 = vector.extract_strided_slice %29 {offsets = [0, 0, 0], sizes = [2, 8, 1], strides = [1, 1, 1]} : vector<2x8x3xf32> to vector<2x8x1xf32>
    %47 = vector.extract_strided_slice %29 {offsets = [0, 0, 1], sizes = [2, 8, 1], strides = [1, 1, 1]} : vector<2x8x3xf32> to vector<2x8x1xf32>
    %48 = vector.extract_strided_slice %29 {offsets = [0, 0, 2], sizes = [2, 8, 1], strides = [1, 1, 1]} : vector<2x8x3xf32> to vector<2x8x1xf32>
    %49 = arith.cmpf ogt, %48, %46 : vector<2x8x1xf32>
    %50 = arith.cmpf ogt, %48, %47 : vector<2x8x1xf32>
    %51 = arith.andi %49, %50 : vector<2x8x1xi1>
    %52 = arith.extui %51 : vector<2x8x1xi1> to vector<2x8x1xi32>
    %53 = arith.sitofp %52 : vector<2x8x1xi32> to vector<2x8x1xf32>
    %cst_31 = arith.constant 1.000000e+00 : f32
    %54 = vector.broadcast %cst_31 : f32 to vector<2x1x1xf32>
    %55 = vector.extract_strided_slice %53 {offsets = [0, 0, 0], sizes = [2, 7, 1], strides = [1, 1, 1]} : vector<2x8x1xf32> to vector<2x7x1xf32>
    %56 = tpu.concatenate %54, %55 in 1 : vector<2x1x1xf32>, vector<2x7x1xf32> -> vector<2x8x1xf32>
    %57 = vector.shape_cast %56 : vector<2x8x1xf32> to vector<2x8xf32>
    %c0_32 = arith.constant 0 : index
    %c0_33 = arith.constant 0 : index
    %58 = vector.load %arg11[%c0_32, %c0_33] : memref<8x8xf32, #tpu.memory_space<vmem>>, vector<8x8xf32>
    %cst_34 = arith.constant dense<0.000000e+00> : vector<2x8xf32>
    %59 = tpu.matmul %57, %58, %cst_34 {dimension_numbers = #tpu.dot_dimension_numbers<[1], [0], [0], [1], [0, 0, 1, 1], [], []>} : vector<2x8xf32>, vector<8x8xf32>, vector<2x8xf32> -> vector<2x8xf32>
    %60 = vector.shape_cast %59 : vector<2x8xf32> to vector<2x8x1xf32>
    %61 = vector.shape_cast %59 : vector<2x8xf32> to vector<2x1x8xf32>
    %62 = vector.broadcast %60 : vector<2x8x1xf32> to vector<2x8x8xf32>
    %63 = vector.broadcast %61 : vector<2x1x8xf32> to vector<2x8x8xf32>
    %64 = arith.cmpf oeq, %62, %63 : vector<2x8x8xf32>
    %65 = arith.extui %64 : vector<2x8x8xi1> to vector<2x8x8xi32>
    %66 = arith.sitofp %65 : vector<2x8x8xi32> to vector<2x8x8xf32>
    %cst_35 = arith.constant 0.000000e+00 : f32
    %67 = vector.broadcast %cst_35 : f32 to vector<2x8x21xf32>
    %68 = tpu.concatenate %45, %34, %66, %67 in 2 : vector<2x8x96xf32>, vector<2x8x3xf32>, vector<2x8x8xf32>, vector<2x8x21xf32> -> vector<2x8x128xf32>
    %c0_36 = arith.constant 0 : index
    %c0_37 = arith.constant 0 : index
    %c0_38 = arith.constant 0 : index
    %69 = vector.load %arg12[%c0_36, %c0_37, %c0_38] : memref<2x8x128xf32, #tpu.memory_space<vmem>>, vector<2x8x128xf32>
    tpu.vector_store %arg12[%c0_36, %c0_37, %c0_38], %68 {strides = array<i32>} : memref<2x8x128xf32, #tpu.memory_space<vmem>>, vector<2x8x128xf32>,
    return
  }
  func.func @transform_0(%arg0: i32) -> (i32, i32, i32) {
    %c0_i32 = arith.constant 0 : i32
    %c0_i32_0 = arith.constant 0 : i32
    %c0_i32_1 = arith.constant 0 : i32
    return %arg0, %c0_i32, %c0_i32_0 : i32, i32, i32
  }
  func.func @transform_1(%arg0: i32) -> (i32, i32, i32) {
    %c0_i32 = arith.constant 0 : i32
    %c0_i32_0 = arith.constant 0 : i32
    %c0_i32_1 = arith.constant 0 : i32
    return %arg0, %c0_i32, %c0_i32_0 : i32, i32, i32
  }
  func.func @transform_2(%arg0: i32) -> (i32, i32, i32) {
    %c0_i32 = arith.constant 0 : i32
    %c0_i32_0 = arith.constant 0 : i32
    %c0_i32_1 = arith.constant 0 : i32
    return %arg0, %c0_i32, %c0_i32_0 : i32, i32, i32
  }
  func.func @transform_3(%arg0: i32) -> (i32, i32) {
    %c0_i32 = arith.constant 0 : i32
    %c0_i32_0 = arith.constant 0 : i32
    %c0_i32_1 = arith.constant 0 : i32
    return %c0_i32, %c0_i32_0 : i32, i32
  }
  func.func @transform_4(%arg0: i32) -> (i32, i32) {
    %c0_i32 = arith.constant 0 : i32
    %c0_i32_0 = arith.constant 0 : i32
    %c0_i32_1 = arith.constant 0 : i32
    return %c0_i32, %c0_i32_0 : i32, i32
  }
  func.func @transform_5(%arg0: i32) -> (i32, i32) {
    %c0_i32 = arith.constant 0 : i32
    %c0_i32_0 = arith.constant 0 : i32
    %c0_i32_1 = arith.constant 0 : i32
    return %c0_i32, %c0_i32_0 : i32, i32
  }
  func.func @transform_6(%arg0: i32) -> (i32, i32) {
    %c0_i32 = arith.constant 0 : i32
    %c0_i32_0 = arith.constant 0 : i32
    %c0_i32_1 = arith.constant 0 : i32
    return %c0_i32, %c0_i32_0 : i32, i32
  }
  func.func @transform_7(%arg0: i32) -> (i32, i32) {
    %c0_i32 = arith.constant 0 : i32
    %c0_i32_0 = arith.constant 0 : i32
    %c0_i32_1 = arith.constant 0 : i32
    return %c0_i32, %c0_i32_0 : i32, i32
  }
  func.func @transform_8(%arg0: i32) -> (i32, i32) {
    %c0_i32 = arith.constant 0 : i32
    %c0_i32_0 = arith.constant 0 : i32
    %c0_i32_1 = arith.constant 0 : i32
    return %c0_i32, %c0_i32_0 : i32, i32
  }
  func.func @transform_9(%arg0: i32) -> (i32, i32) {
    %c0_i32 = arith.constant 0 : i32
    %c0_i32_0 = arith.constant 0 : i32
    %c0_i32_1 = arith.constant 0 : i32
    return %c0_i32, %c0_i32_0 : i32, i32
  }
  func.func @transform_10(%arg0: i32) -> (i32, i32) {
    %c0_i32 = arith.constant 0 : i32
    %c0_i32_0 = arith.constant 0 : i32
    %c0_i32_1 = arith.constant 0 : i32
    return %c0_i32, %c0_i32_0 : i32, i32
  }
  func.func @transform_11(%arg0: i32) -> (i32, i32, i32) {
    %c0_i32 = arith.constant 0 : i32
    %c0_i32_0 = arith.constant 0 : i32
    %c0_i32_1 = arith.constant 0 : i32
    return %arg0, %c0_i32, %c0_i32_0 : i32, i32, i32
  }
}

</mosaic_0001>

<llo_original>
// kernel: biaffine_score_layer_forward.1
$region0: #{biaffine_score_layer_forward.1}
  #allocation0 [shape = 'u32[]', space=smem, size = 0x4, offset = 0x4, fixed_abs, tag = 'smem constant byte address 0x4 - core index']
  #allocation1 [shape = 'u32[144,128]{1,0:T(1,128)}', space=vmem, size = 0x12000, scoped, tag = 'internal scratch']
  %s0 = inlined_call_operand.hbm [shape: f32[2,8,32], index: 0, kind: input, shape index: {}]
  %s1 = inlined_call_operand.hbm [shape: f32[2,8,32], index: 1, kind: input, shape index: {}]
  %s2 = inlined_call_operand.hbm [shape: f32[2,8,32], index: 2, kind: input, shape index: {}]
  %s3 = inlined_call_operand.hbm [shape: bf16[32,96], index: 3, kind: input, shape index: {}]
  %s4 = inlined_call_operand.vmem [shape: bf16[96,3], index: 4, kind: input, shape index: {}]
  %s5 = inlined_call_operand.hbm [shape: bf16[32,3], index: 5, kind: input, shape index: {}]
  %s6 = inlined_call_operand.hbm [shape: bf16[32,3], index: 6, kind: input, shape index: {}]
  %s7 = inlined_call_operand.vmem [shape: f32[1,3], index: 7, kind: input, shape index: {}]
  %s8 = inlined_call_operand.hbm [shape: f32[6,96], index: 8, kind: input, shape index: {}]
  %s9 = inlined_call_operand.vmem [shape: f32[1,96], index: 9, kind: input, shape index: {}]
  %s10 = inlined_call_operand.vmem [shape: f32[8,8], index: 10, kind: input, shape index: {}]
  %s11 = inlined_call_operand.vmem [shape: f32[2,8,128], index: 11, kind: output, shape index: {}]
  %s12 = sld [smem:[#allocation0]]
  $region82: #{biaffine_score_layer_forward.1} parent=0
    _
  %s14 = ssub.s32 1, %s12
  %s15 = scalar_select 0, %s14, %s12
  $region1: #{biaffine_score_layer_forward.1} parent=0
    #allocation2 [shape = 'u8[8192]{0}', space=vmem, size = 0x2000, scoped, tag = 'input window, operand 0, single buffered']
    #allocation3 [shape = 's32[1]{0}', space=sflag, size = 0x4, scoped, tag = 'scoped memory for biaffine_score_layer_forward.1']
    #allocation4 [shape = 'u8[8192]{0}', space=vmem, size = 0x2000, scoped, tag = 'input window, operand 1, single buffered']
    #allocation5 [shape = 's32[1]{0}', space=sflag, size = 0x4, scoped, tag = 'scoped memory for biaffine_score_layer_forward.1']
    #allocation6 [shape = 'u8[8192]{0}', space=vmem, size = 0x2000, scoped, tag = 'input window, operand 2, single buffered']
    #allocation7 [shape = 'u8[8192]{0}', space=vmem, size = 0x2000, scoped, tag = 'input window, operand 3, single buffered']
    #allocation8 [shape = 's32[1]{0}', space=sflag, size = 0x4, scoped, tag = 'scoped memory for biaffine_score_layer_forward.1']
    #allocation9 [shape = 'u8[8192]{0}', space=vmem, size = 0x2000, scoped, tag = 'input window, operand 5, single buffered']
    #allocation10 [shape = 'u8[8192]{0}', space=vmem, size = 0x2000, scoped, tag = 'input window, operand 6, single buffered']
    #allocation11 [shape = 's32[1]{0}', space=sflag, size = 0x4, scoped, tag = 'scoped memory for biaffine_score_layer_forward.1']
    #allocation12 [shape = 'u8[4096]{0}', space=vmem, size = 0x1000, scoped, tag = 'input window, operand 8, single buffered']
    %16 = vsyncpa [#allocation3], 0
    %17 = vsyncpa [#allocation5], 0
    %18 = vsyncpa [#allocation8], 0
    %19 = vsyncpa [#allocation11], 0
    // Predicated region
    $region2: #{biaffine_score_layer_forward.1} parent=1 // pred_check
      _
    $region3: #{biaffine_score_layer_forward.1} parent=1 // pred_check_branch
      %21 = sbr.rel (0) target = $region5
    $region4: #{biaffine_score_layer_forward.1} parent=1 // pred_region
      %s23 = ssub.s32 256, 256
      %24 = vsyncadd [#allocation3], %s23
      %s25 = sshll.u32 [#allocation2], 4
      %s26 = int_to_ptr.vmem [resolvable:$true] %s25
      %31 = dma.hbm_to_vmem [thread:$0]  %s0, 256, %s26, [#allocation3], 128, 128, 8
    $region5: #{biaffine_score_layer_forward.1} parent=1 // pred_fallthru
      _
    // Predicated region
    $region6: #{biaffine_score_layer_forward.1} parent=1 // pred_check
      _
    $region7: #{biaffine_score_layer_forward.1} parent=1 // pred_check_branch
      %33 = sbr.rel (0) target = $region9
    $region8: #{biaffine_score_layer_forward.1} parent=1 // pred_region
      %s35 = ssub.s32 256, 256
      %36 = vsyncadd [#allocation5], %s35
      %s37 = sshll.u32 [#allocation4], 4
      %s38 = int_to_ptr.vmem [resolvable:$true] %s37
      %43 = dma.hbm_to_vmem [thread:$0]  %s1, 256, %s38, [#allocation5], 128, 128, 8
    $region9: #{biaffine_score_layer_forward.1} parent=1 // pred_fallthru
      _
    // Predicated region
    $region10: #{biaffine_score_layer_forward.1} parent=1 // pred_check
      _
    $region11: #{biaffine_score_layer_forward.1} parent=1 // pred_check_branch
      %45 = sbr.rel (0) target = $region13
    $region12: #{biaffine_score_layer_forward.1} parent=1 // pred_region
      %s47 = ssub.s32 256, 256
      %48 = vsyncadd [#allocation5], %s47
      %s49 = sshll.u32 [#allocation6], 4
      %s50 = int_to_ptr.vmem [resolvable:$true] %s49
      %55 = dma.hbm_to_vmem [thread:$0]  %s2, 256, %s50, [#allocation5], 128, 128, 8
    $region13: #{biaffine_score_layer_forward.1} parent=1 // pred_fallthru
      _
    // Predicated region
    $region14: #{biaffine_score_layer_forward.1} parent=1 // pred_check
      _
    $region15: #{biaffine_score_layer_forward.1} parent=1 // pred_check_branch
      %57 = sbr.rel (0) target = $region17
    $region16: #{biaffine_score_layer_forward.1} parent=1 // pred_region
      %s59 = ssub.s32 256, 256
      %60 = vsyncadd [#allocation8], %s59
      %s61 = sshll.u32 [#allocation7], 4
      %s62 = int_to_ptr.vmem [resolvable:$true] %s61
      %67 = dma.hbm_to_vmem [thread:$0]  %s3, 256, %s62, [#allocation8], 64, 64, 4
    $region17: #{biaffine_score_layer_forward.1} parent=1 // pred_fallthru
      _
    // Predicated region
    $region18: #{biaffine_score_layer_forward.1} parent=1 // pred_check
      _
    $region19: #{biaffine_score_layer_forward.1} parent=1 // pred_check_branch
      %69 = sbr.rel (0) target = $region21
    $region20: #{biaffine_score_layer_forward.1} parent=1 // pred_region
      _
    $region21: #{biaffine_score_layer_forward.1} parent=1 // pred_fallthru
      _
    // Predicated region
    $region22: #{biaffine_score_layer_forward.1} parent=1 // pred_check
      _
    $region23: #{biaffine_score_layer_forward.1} parent=1 // pred_check_branch
      %71 = sbr.rel (0) target = $region25
    $region24: #{biaffine_score_layer_forward.1} parent=1 // pred_region
      %s73 = ssub.s32 256, 256
      %74 = vsyncadd [#allocation8], %s73
      %s75 = sshll.u32 [#allocation9], 4
      %s76 = int_to_ptr.vmem [resolvable:$true] %s75
      %81 = dma.hbm_to_vmem [thread:$0]  %s5, 256, %s76, [#allocation8], 64, 64, 4
    $region25: #{biaffine_score_layer_forward.1} parent=1 // pred_fallthru
      _
    // Predicated region
    $region26: #{biaffine_score_layer_forward.1} parent=1 // pred_check
      _
    $region27: #{biaffine_score_layer_forward.1} parent=1 // pred_check_branch
      %83 = sbr.rel (0) target = $region29
    $region28: #{biaffine_score_layer_forward.1} parent=1 // pred_region
      %s85 = ssub.s32 256, 256
      %86 = vsyncadd [#allocation11], %s85
      %s87 = sshll.u32 [#allocation10], 4
      %s88 = int_to_ptr.vmem [resolvable:$true] %s87
      %93 = dma.hbm_to_vmem [thread:$0]  %s6, 256, %s88, [#allocation11], 64, 64, 4
    $region29: #{biaffine_score_layer_forward.1} parent=1 // pred_fallthru
      _
    // Predicated region
    $region30: #{biaffine_score_layer_forward.1} parent=1 // pred_check
      _
    $region31: #{biaffine_score_layer_forward.1} parent=1 // pred_check_branch
      %95 = sbr.rel (0) target = $region33
    $region32: #{biaffine_score_layer_forward.1} parent=1 // pred_region
      _
    $region33: #{biaffine_score_layer_forward.1} parent=1 // pred_fallthru
      _
    // Predicated region
    $region34: #{biaffine_score_layer_forward.1} parent=1 // pred_check
      _
    $region35: #{biaffine_score_layer_forward.1} parent=1 // pred_check_branch
      %97 = sbr.rel (0) target = $region37
    $region36: #{biaffine_score_layer_forward.1} parent=1 // pred_region
      %s99 = ssub.s32 128, 128
      %100 = vsyncadd [#allocation11], %s99
      %s102 = sshll.u32 [#allocation12], 4
      %s103 = int_to_ptr.vmem [resolvable:$true] %s102
      %105 = dma.hbm_to_vmem [thread:$0]  %s8, 128, %s103, [#allocation11]
    $region37: #{biaffine_score_layer_forward.1} parent=1 // pred_fallthru
      _
    // Predicated region
    $region38: #{biaffine_score_layer_forward.1} parent=1 // pred_check
      _
    $region39: #{biaffine_score_layer_forward.1} parent=1 // pred_check_branch
      %107 = sbr.rel (0) target = $region41
    $region40: #{biaffine_score_layer_forward.1} parent=1 // pred_region
      _
    $region41: #{biaffine_score_layer_forward.1} parent=1 // pred_fallthru
      _
    // Predicated region
    $region42: #{biaffine_score_layer_forward.1} parent=1 // pred_check
      _
    $region43: #{biaffine_score_layer_forward.1} parent=1 // pred_check_branch
      %109 = sbr.rel (0) target = $region45
    $region44: #{biaffine_score_layer_forward.1} parent=1 // pred_region
      _
    $region45: #{biaffine_score_layer_forward.1} parent=1 // pred_fallthru
      _
    // Predicated region
    $region46: #{biaffine_score_layer_forward.1} parent=1 // pred_check
      _
    $region47: #{biaffine_score_layer_forward.1} parent=1 // pred_check_branch
      %111 = sbr.rel (0) target = $region49
    $region48: #{biaffine_score_layer_forward.1} parent=1 // pred_region
      %112 = dma.done [#allocation3], 256
    $region49: #{biaffine_score_layer_forward.1} parent=1 // pred_fallthru
      _
    // Predicated region
    $region50: #{biaffine_score_layer_forward.1} parent=1 // pred_check
      _
    $region51: #{biaffine_score_layer_forward.1} parent=1 // pred_check_branch
      %114 = sbr.rel (0) target = $region53
    $region52: #{biaffine_score_layer_forward.1} parent=1 // pred_region
      %115 = dma.done [#allocation5], 256
    $region53: #{biaffine_score_layer_forward.1} parent=1 // pred_fallthru
      _
    // Predicated region
    $region54: #{biaffine_score_layer_forward.1} parent=1 // pred_check
      _
    $region55: #{biaffine_score_layer_forward.1} parent=1 // pred_check_branch
      %117 = sbr.rel (0) target = $region57
    $region56: #{biaffine_score_layer_forward.1} parent=1 // pred_region
      %118 = dma.done [#allocation5], 256
    $region57: #{biaffine_score_layer_forward.1} parent=1 // pred_fallthru
      _
    // Predicated region
    $region58: #{biaffine_score_layer_forward.1} parent=1 // pred_check
      _
    $region59: #{biaffine_score_layer_forward.1} parent=1 // pred_check_branch
      %120 = sbr.rel (0) target = $region61
    $region60: #{biaffine_score_layer_forward.1} parent=1 // pred_region
      %121 = dma.done [#allocation8], 256
    $region61: #{biaffine_score_layer_forward.1} parent=1 // pred_fallthru
      _
    // Predicated region
    $region62: #{biaffine_score_layer_forward.1} parent=1 // pred_check
      _
    $region63: #{biaffine_score_layer_forward.1} parent=1 // pred_check_branch
      %123 = sbr.rel (0) target = $region65
    $region64: #{biaffine_score_layer_forward.1} parent=1 // pred_region
      %124 = dma.done [#allocation8], 256
    $region65: #{biaffine_score_layer_forward.1} parent=1 // pred_fallthru
      _
    // Predicated region
    $region66: #{biaffine_score_layer_forward.1} parent=1 // pred_check
      _
    $region67: #{biaffine_score_layer_forward.1} parent=1 // pred_check_branch
      %126 = sbr.rel (0) target = $region69
    $region68: #{biaffine_score_layer_forward.1} parent=1 // pred_region
      %127 = dma.done [#allocation11], 256
    $region69: #{biaffine_score_layer_forward.1} parent=1 // pred_fallthru
      _
    // Predicated region
    $region70: #{biaffine_score_layer_forward.1} parent=1 // pred_check
      _
    $region71: #{biaffine_score_layer_forward.1} parent=1 // pred_check_branch
      %129 = sbr.rel (0) target = $region73
    $region72: #{biaffine_score_layer_forward.1} parent=1 // pred_region
      %130 = dma.done [#allocation11], 128
    $region73: #{biaffine_score_layer_forward.1} parent=1 // pred_fallthru
      _
    %v132 = vld [vmem:[#allocation2] sm:$0xff]
    %v133 = vld [vmem:[#allocation2 + $0x8] sm:$0xff]
    %v134 = vld [vmem:[#allocation4] sm:$0xff]
    %v135 = vld [vmem:[#allocation4 + $0x8] sm:$0xff]
    %v136 = vadd.f32 %v132, %v134
    %v137 = vadd.f32 %v133, %v135
    %v138 = vld [vmem:[#allocation6] sm:$0xff]
    %v139 = vld [vmem:[#allocation6 + $0x8] sm:$0xff]
    %v140 = vadd.f32 %v138, %v134
    %v141 = vadd.f32 %v139, %v135
    %v144 = vrot.slane %v140, 1
    %v145 = vrot.slane %v141, 1
    %vm148 = vcmask 1046528
    %v149 = vsel %vm148, %v144, %v144
    %v150 = vsel %vm148, %v145, %v145
    %v151 = vpack.c.bf16 %v137, %v136
    %v152 = vpack.c.bf16 %v150, %v149
    %v153 = vld [vmem:[#allocation7] sm:$0xf]
    %v154 = vld [vmem:[#allocation7 + $0x4] sm:$0xf]
    %v155 = vld [vmem:[#allocation7 + $0x8] sm:$0xf]
    %v156 = vld [vmem:[#allocation7 + $0xc] sm:$0xf]
    %v161 = vunpack.c.l.b16 %v153
    %v162 = vunpack.c.l.b16 %v154
    %v163 = vunpack.c.l.b16 %v155
    %v164 = vunpack.c.l.b16 %v156
    %v165 = vpack.c.b16 %v162, %v161
    %v166 = vpack.c.b16 %v164, %v163
    %vm169 = vcmask 261120
    %v171 = vsel %vm169, %v151, 0
    %173 = vmatprep.subr.bf16.mxu0 0
    %174 = vmatpush1.bf16.msra.mxu0 %v165
    %175 = vmatprep.subr.bf16.mxu0 0
    %176 = vmatpush1.bf16.msra.mxu0 %v166
    %177 = vmatprep.subr.bf16.mxu0 0
    %178 = vmatpush1.bf16.msra.mxu0 0
    %179 = vmatprep.subr.bf16.mxu0 0
    %180 = vmatpush1.bf16.msra.mxu0 0
    %181 = vmatprep.subr.bf16.mxu0 0
    %182 = vmatpush1.bf16.msra.mxu0 0
    %183 = vmatprep.subr.bf16.mxu0 0
    %184 = vmatpush1.bf16.msra.mxu0 0
    %185 = vmatprep.subr.bf16.mxu0 0
    %186 = vmatpush1.bf16.msra.mxu0 0
    %187 = vmatprep.subr.bf16.mxu0 0
    %188 = vmatpush1.bf16.msra.mxu0 0
    %189 = vmatprep.subr.bf16.mxu0 0
    %190 = vmatpush1.bf16.msra.mxu0 0
    %191 = vmatprep.subr.bf16.mxu0 0
    %192 = vmatpush1.bf16.msra.mxu0 0
    %193 = vmatprep.subr.bf16.mxu0 0
    %194 = vmatpush1.bf16.msra.mxu0 0
    %195 = vmatprep.subr.bf16.mxu0 0
    %196 = vmatpush1.bf16.msra.mxu0 0
    %197 = vmatprep.subr.bf16.mxu0 0
    %198 = vmatpush1.bf16.msra.mxu0 0
    %199 = vmatprep.subr.bf16.mxu0 0
    %200 = vmatpush1.bf16.msra.mxu0 0
    %201 = vmatprep.subr.bf16.mxu0 0
    %202 = vmatpush1.bf16.msra.mxu0 0
    %203 = vmatprep.subr.bf16.mxu0 0
    %204 = vmatpush1.bf16.msra.mxu0 0
    %205 = vmatprep.mubr.bf16.mxu0 0
    %206 = vmatmul.mubr.bf16.gmra.mrb[0].mxu0 %v171
    %v207 = vpop.f32.mrb[0].mxu0
    %v208 = vadd.f32 0.0, %v207
    %v209 = vpop.f32.mrb[0].mxu0
    %v210 = vpop.f32.mrb[0].mxu0
    %v211 = vadd.f32 0.0, %v210
    %v212 = vpop.f32.mrb[0].mxu0
    %213 = vdwg.mxu0
    %216 = vrot.lane.b32.xlu0 %v149, 32
    %v217 = vpop.permute.xlu0 %216
    %218 = vrot.lane.b32.xlu0 %v150, 32
    %v219 = vpop.permute.xlu0 %218
    %222 = vrot.lane.b32.xlu0 %v149, 64
    %v223 = vpop.permute.xlu0 %222
    %224 = vrot.lane.b32.xlu0 %v150, 64
    %v225 = vpop.permute.xlu0 %224
    %v228 = vsel %vm169, %v149, %v217
    %v229 = vsel %vm169, %v150, %v219
    %vm230 = vcmask 523264
    %v231 = vsel %vm230, %v228, %v223
    %v232 = vsel %vm230, %v229, %v225
    %v233 = vmul.f32 %v208, %v231
    %v234 = vmul.f32 %v211, %v232
    %v235 = vpack.c.bf16 %v234, %v233
    %v236 = vld [vmem:[%s4] sm:$0xf]
    %v237 = vld [vmem:[%s4 + $0x4] sm:$0xf]
    %v238 = vld [vmem:[%s4 + $0x8] sm:$0xf]
    %v239 = vld [vmem:[%s4 + $0xc] sm:$0xf]
    %v240 = vld [vmem:[%s4 + $0x10] sm:$0xf]
    %v241 = vld [vmem:[%s4 + $0x14] sm:$0xf]
    %v242 = vld [vmem:[%s4 + $0x18] sm:$0xf]
    %v243 = vld [vmem:[%s4 + $0x1c] sm:$0xf]
    %v244 = vld [vmem:[%s4 + $0x20] sm:$0xf]
    %v245 = vld [vmem:[%s4 + $0x24] sm:$0xf]
    %v246 = vld [vmem:[%s4 + $0x28] sm:$0xf]
    %v247 = vld [vmem:[%s4 + $0x2c] sm:$0xf]
    %v248 = vld [vmem:[#allocation9] sm:$0xf]
    %v249 = vld [vmem:[#allocation9 + $0x4] sm:$0xf]
    %v250 = vld [vmem:[#allocation9 + $0x8] sm:$0xf]
    %v251 = vld [vmem:[#allocation9 + $0xc] sm:$0xf]
    %v256 = vunpack.c.l.b16 %v248
    %v257 = vunpack.c.l.b16 %v249
    %v258 = vunpack.c.l.b16 %v250
    %v259 = vunpack.c.l.b16 %v251
    %v260 = vpack.c.b16 %v257, %v256
    %v261 = vpack.c.b16 %v259, %v258
    %264 = vmatprep.subr.bf16.mxu0 0
    %265 = vmatpush1.bf16.msra.mxu0 %v260
    %266 = vmatprep.subr.bf16.mxu0 0
    %267 = vmatpush1.bf16.msra.mxu0 %v261
    %268 = vmatprep.subr.bf16.mxu0 0
    %269 = vmatpush1.bf16.msra.mxu0 0
    %270 = vmatprep.subr.bf16.mxu0 0
    %271 = vmatpush1.bf16.msra.mxu0 0
    %272 = vmatprep.subr.bf16.mxu0 0
    %273 = vmatpush1.bf16.msra.mxu0 0
    %274 = vmatprep.subr.bf16.mxu0 0
    %275 = vmatpush1.bf16.msra.mxu0 0
    %276 = vmatprep.subr.bf16.mxu0 0
    %277 = vmatpush1.bf16.msra.mxu0 0
    %278 = vmatprep.subr.bf16.mxu0 0
    %279 = vmatpush1.bf16.msra.mxu0 0
    %280 = vmatprep.subr.bf16.mxu0 0
    %281 = vmatpush1.bf16.msra.mxu0 0
    %282 = vmatprep.subr.bf16.mxu0 0
    %283 = vmatpush1.bf16.msra.mxu0 0
    %284 = vmatprep.subr.bf16.mxu0 0
    %285 = vmatpush1.bf16.msra.mxu0 0
    %286 = vmatprep.subr.bf16.mxu0 0
    %287 = vmatpush1.bf16.msra.mxu0 0
    %288 = vmatprep.subr.bf16.mxu0 0
    %289 = vmatpush1.bf16.msra.mxu0 0
    %290 = vmatprep.subr.bf16.mxu0 0
    %291 = vmatpush1.bf16.msra.mxu0 0
    %292 = vmatprep.subr.bf16.mxu0 0
    %293 = vmatpush1.bf16.msra.mxu0 0
    %294 = vmatprep.subr.bf16.mxu0 0
    %295 = vmatpush1.bf16.msra.mxu0 0
    %296 = vmatprep.mubr.bf16.mxu0 0
    %297 = vmatmul.mubr.bf16.gmra.mrb[0].mxu0 %v171
    %v298 = vpop.f32.mrb[0].mxu0
    %v299 = vadd.f32 0.0, %v298
    %v300 = vpop.f32.mrb[0].mxu0
    %v301 = vpop.f32.mrb[0].mxu0
    %v302 = vadd.f32 0.0, %v301
    %v303 = vpop.f32.mrb[0].mxu0
    %304 = vdwg.mxu0
    %v317 = vunpack.c.l.b16 %v236
    %v318 = vunpack.c.l.b16 %v237
    %v319 = vunpack.c.l.b16 %v238
    %v320 = vunpack.c.l.b16 %v239
    %v321 = vunpack.c.l.b16 %v240
    %v322 = vunpack.c.l.b16 %v241
    %v323 = vunpack.c.l.b16 %v242
    %v324 = vunpack.c.l.b16 %v243
    %v325 = vunpack.c.l.b16 %v244
    %v326 = vunpack.c.l.b16 %v245
    %v327 = vunpack.c.l.b16 %v246
    %v328 = vunpack.c.l.b16 %v247
    %v329 = vpack.c.b16 %v318, %v317
    %v330 = vpack.c.b16 %v320, %v319
    %v331 = vpack.c.b16 %v322, %v321
    %v332 = vpack.c.b16 %v324, %v323
    %v333 = vpack.c.b16 %v326, %v325
    %v334 = vpack.c.b16 %v328, %v327
    %vm341 = vcmask 785408
    %v343 = vsel %vm341, %v235, 0
    %345 = vmatprep.subr.bf16.mxu0 0
    %346 = vmatpush1.bf16.msra.mxu0 %v329
    %347 = vmatprep.subr.bf16.mxu0 0
    %348 = vmatpush1.bf16.msra.mxu0 %v330
    %349 = vmatprep.subr.bf16.mxu0 0
    %350 = vmatpush1.bf16.msra.mxu0 %v331
    %351 = vmatprep.subr.bf16.mxu0 0
    %352 = vmatpush1.bf16.msra.mxu0 %v332
    %353 = vmatprep.subr.bf16.mxu0 0
    %354 = vmatpush1.bf16.msra.mxu0 %v333
    %355 = vmatprep.subr.bf16.mxu0 0
    %356 = vmatpush1.bf16.msra.mxu0 %v334
    %357 = vmatprep.subr.bf16.mxu0 0
    %358 = vmatpush1.bf16.msra.mxu0 0
    %359 = vmatprep.subr.bf16.mxu0 0
    %360 = vmatpush1.bf16.msra.mxu0 0
    %361 = vmatprep.subr.bf16.mxu0 0
    %362 = vmatpush1.bf16.msra.mxu0 0
    %363 = vmatprep.subr.bf16.mxu0 0
    %364 = vmatpush1.bf16.msra.mxu0 0
    %365 = vmatprep.subr.bf16.mxu0 0
    %366 = vmatpush1.bf16.msra.mxu0 0
    %367 = vmatprep.subr.bf16.mxu0 0
    %368 = vmatpush1.bf16.msra.mxu0 0
    %369 = vmatprep.subr.bf16.mxu0 0
    %370 = vmatpush1.bf16.msra.mxu0 0
    %371 = vmatprep.subr.bf16.mxu0 0
    %372 = vmatpush1.bf16.msra.mxu0 0
    %373 = vmatprep.subr.bf16.mxu0 0
    %374 = vmatpush1.bf16.msra.mxu0 0
    %375 = vmatprep.subr.bf16.mxu0 0
    %376 = vmatpush1.bf16.msra.mxu0 0
    %377 = vmatprep.mubr.bf16.mxu0 0
    %378 = vmatmul.mubr.bf16.gmra.mrb[0].mxu0 %v343
    %v379 = vpop.f32.mrb[0].mxu0
    %v380 = vadd.f32 %v299, %v379
    %v381 = vpop.f32.mrb[0].mxu0
    %v382 = vpop.f32.mrb[0].mxu0
    %v383 = vadd.f32 %v302, %v382
    %v384 = vpop.f32.mrb[0].mxu0
    %385 = vdwg.mxu0
    %v386 = vld [vmem:[#allocation10] sm:$0xf]
    %v387 = vld [vmem:[#allocation10 + $0x4] sm:$0xf]
    %v388 = vld [vmem:[#allocation10 + $0x8] sm:$0xf]
    %v389 = vld [vmem:[#allocation10 + $0xc] sm:$0xf]
    %v394 = vunpack.c.l.b16 %v386
    %v395 = vunpack.c.l.b16 %v387
    %v396 = vunpack.c.l.b16 %v388
    %v397 = vunpack.c.l.b16 %v389
    %v398 = vpack.c.b16 %v395, %v394
    %v399 = vpack.c.b16 %v397, %v396
    %v403 = vsel %vm169, %v152, 0
    %405 = vmatprep.subr.bf16.mxu0 0
    %406 = vmatpush1.bf16.msra.mxu0 %v398
    %407 = vmatprep.subr.bf16.mxu0 0
    %408 = vmatpush1.bf16.msra.mxu0 %v399
    %409 = vmatprep.subr.bf16.mxu0 0
    %410 = vmatpush1.bf16.msra.mxu0 0
    %411 = vmatprep.subr.bf16.mxu0 0
    %412 = vmatpush1.bf16.msra.mxu0 0
    %413 = vmatprep.subr.bf16.mxu0 0
    %414 = vmatpush1.bf16.msra.mxu0 0
    %415 = vmatprep.subr.bf16.mxu0 0
    %416 = vmatpush1.bf16.msra.mxu0 0
    %417 = vmatprep.subr.bf16.mxu0 0
    %418 = vmatpush1.bf16.msra.mxu0 0
    %419 = vmatprep.subr.bf16.mxu0 0
    %420 = vmatpush1.bf16.msra.mxu0 0
    %421 = vmatprep.subr.bf16.mxu0 0
    %422 = vmatpush1.bf16.msra.mxu0 0
    %423 = vmatprep.subr.bf16.mxu0 0
    %424 = vmatpush1.bf16.msra.mxu0 0
    %425 = vmatprep.subr.bf16.mxu0 0
    %426 = vmatpush1.bf16.msra.mxu0 0
    %427 = vmatprep.subr.bf16.mxu0 0
    %428 = vmatpush1.bf16.msra.mxu0 0
    %429 = vmatprep.subr.bf16.mxu0 0
    %430 = vmatpush1.bf16.msra.mxu0 0
    %431 = vmatprep.subr.bf16.mxu0 0
    %432 = vmatpush1.bf16.msra.mxu0 0
    %433 = vmatprep.subr.bf16.mxu0 0
    %434 = vmatpush1.bf16.msra.mxu0 0
    %435 = vmatprep.subr.bf16.mxu0 0
    %436 = vmatpush1.bf16.msra.mxu0 0
    %437 = vmatprep.mubr.bf16.mxu0 0
    %438 = vmatmul.mubr.bf16.gmra.mrb[0].mxu0 %v403
    %v439 = vpop.f32.mrb[0].mxu0
    %v440 = vadd.f32 0.0, %v439
    %v441 = vpop.f32.mrb[0].mxu0
    %v442 = vpop.f32.mrb[0].mxu0
    %v443 = vadd.f32 0.0, %v442
    %v444 = vpop.f32.mrb[0].mxu0
    %445 = vdwg.mxu0
    %v446 = vadd.f32 %v380, %v440
    %v447 = vadd.f32 %v383, %v443
    %v448 = vld [vmem:[%s7] sm:$0x1]
    %v450 = vlaneseq
    %v451 = vshrl.u32 %v450, 7
    %v452 = vsub.s32 0, %v451
    %v453 = vrot.slane %v448, %v452
    %v455 = vadd.f32 %v446, %v453
    %v456 = vadd.f32 %v447, %v453
    %v457 = vlaneseq
    %v458 = vshrl.u32 %v457, 7
    %vm459 = vcmp.lt.s32.totalorder %v458, 7
    %v460 = vsel %vm459, %v455, 0.0
    %v461 = vsel %vm459, %v456, 0.0
    %v464 = vrot.slane %v455, 7
    %v465 = vrot.slane %v456, 7
    %vm468 = vcmask 1040384
    %v469 = vsel %vm468, 0.0, %v464
    %v470 = vsel %vm468, 0.0, %v465
    %473 = vrot.lane.b32.xlu0 %v469, 3
    %v474 = vpop.permute.xlu0 %473
    %475 = vrot.lane.b32.xlu0 %v470, 3
    %v476 = vpop.permute.xlu0 %475
    %vm479 = vcmask 23552
    %v480 = vsel %vm479, %v460, %v474
    %v481 = vsel %vm479, %v461, %v476
    %v482 = vld [vmem:[#allocation12] sm:$0x3f]
    %v483 = vld [vmem:[%s9] sm:$0x1]
    %v485 = vlaneseq
    %v486 = vshrl.u32 %v485, 7
    %v487 = vsub.s32 0, %v486
    %v488 = vrot.slane %v483, %v487
    %vm490 = vcmask 48128
    %v492 = vsel %vm490, %v480, 0
    %v495 = vsel %vm490, %v481, 0
    %vm497 = vcmask 1045504
    %v499 = vsel %vm497, %v482, 0
    %501 = vmatprep.subr.mxu0 0.0
    %502 = vmatpush1.msra.mxu0 %v499
    %503 = vmatprep.subr.mxu0 0.0
    %504 = vmatpush1.msra.mxu0 0.0
    %505 = vmatprep.subr.mxu0 0.0
    %506 = vmatpush1.msra.mxu0 0.0
    %507 = vmatprep.subr.mxu0 0.0
    %508 = vmatpush1.msra.mxu0 0.0
    %509 = vmatprep.subr.mxu0 0.0
    %510 = vmatpush1.msra.mxu0 0.0
    %511 = vmatprep.subr.mxu0 0.0
    %512 = vmatpush1.msra.mxu0 0.0
    %513 = vmatprep.subr.mxu0 0.0
    %514 = vmatpush1.msra.mxu0 0.0
    %515 = vmatprep.subr.mxu0 0.0
    %516 = vmatpush1.msra.mxu0 0.0
    %517 = vmatprep.subr.mxu0 0.0
    %518 = vmatpush1.msra.mxu0 0.0
    %519 = vmatprep.subr.mxu0 0.0
    %520 = vmatpush1.msra.mxu0 0.0
    %521 = vmatprep.subr.mxu0 0.0
    %522 = vmatpush1.msra.mxu0 0.0
    %523 = vmatprep.subr.mxu0 0.0
    %524 = vmatpush1.msra.mxu0 0.0
    %525 = vmatprep.subr.mxu0 0.0
    %526 = vmatpush1.msra.mxu0 0.0
    %527 = vmatprep.subr.mxu0 0.0
    %528 = vmatpush1.msra.mxu0 0.0
    %529 = vmatprep.subr.mxu0 0.0
    %530 = vmatpush1.msra.mxu0 0.0
    %531 = vmatprep.subr.mxu0 0.0
    %532 = vmatpush1.msra.mxu0 0.0
    %533 = vmatprep.subr.mxu0 0.0
    %534 = vmatpush1.msra.mxu0 0.0
    %535 = vmatprep.subr.mxu0 0.0
    %536 = vmatpush1.msra.mxu0 0.0
    %537 = vmatprep.subr.mxu0 0.0
    %538 = vmatpush1.msra.mxu0 0.0
    %539 = vmatprep.subr.mxu0 0.0
    %540 = vmatpush1.msra.mxu0 0.0
    %541 = vmatprep.subr.mxu0 0.0
    %542 = vmatpush1.msra.mxu0 0.0
    %543 = vmatprep.subr.mxu0 0.0
    %544 = vmatpush1.msra.mxu0 0.0
    %545 = vmatprep.subr.mxu0 0.0
    %546 = vmatpush1.msra.mxu0 0.0
    %547 = vmatprep.subr.mxu0 0.0
    %548 = vmatpush1.msra.mxu0 0.0
    %549 = vmatprep.subr.mxu0 0.0
    %550 = vmatpush1.msra.mxu0 0.0
    %551 = vmatprep.subr.mxu0 0.0
    %552 = vmatpush1.msra.mxu0 0.0
    %553 = vmatprep.subr.mxu0 0.0
    %554 = vmatpush1.msra.mxu0 0.0
    %555 = vmatprep.subr.mxu0 0.0
    %556 = vmatpush1.msra.mxu0 0.0
    %557 = vmatprep.subr.mxu0 0.0
    %558 = vmatpush1.msra.mxu0 0.0
    %559 = vmatprep.subr.mxu0 0.0
    %560 = vmatpush1.msra.mxu0 0.0
    %561 = vmatprep.subr.mxu0 0.0
    %562 = vmatpush1.msra.mxu0 0.0
    %563 = vmatprep.subr.mxu0 0.0
    %564 = vmatpush1.msra.mxu0 0.0
    %565 = vmatprep.mubr.f32.mxu0 0.0
    %566 = vmatmul.mubr.f32.gmra.mrb[0].mxu0 %v492
    %v567 = vpop.f32.mrb[0].mxu0
    %v568 = vadd.f32 %v488, %v567
    %v569 = vpop.f32.mrb[0].mxu0
    %570 = vmatprep.mubr.f32.mxu0 0.0
    %571 = vmatmul.mubr.f32.gmra.mrb[0].mxu0 %v495
    %v572 = vpop.f32.mrb[0].mxu0
    %v573 = vadd.f32 %v488, %v572
    %v574 = vpop.f32.mrb[0].mxu0
    %575 = vdwg.mxu0
    %576 = vrot.lane.b32.xlu0 %v455, 2
    %v577 = vpop.permute.xlu0 %576
    %578 = vrot.lane.b32.xlu0 %v456, 2
    %v579 = vpop.permute.xlu0 %578
    %vm582 = vcmp.gt.f32.partialorder %v455, %v577
    %vm583 = vcmp.gt.f32.partialorder %v456, %v579
    %584 = vrot.lane.b32.xlu0 %v455, 1
    %v585 = vpop.permute.xlu0 %584
    %586 = vrot.lane.b32.xlu0 %v456, 1
    %v587 = vpop.permute.xlu0 %586
    %vm590 = vcmp.gt.f32.partialorder %v455, %v585
    %vm591 = vcmp.gt.f32.partialorder %v456, %v587
    %vm592 = vmand %vm582, %vm590
    %vm593 = vmand %vm583, %vm591
    %v594 = vsel %vm592, 1, 0
    %v595 = vsel %vm593, 1, 0
    %v596 = vcvt.s32.f32 %v594
    %v597 = vcvt.s32.f32 %v595
    %v600 = vrot.slane %v596, 7
    %v601 = vrot.slane %v597, 7
    %602 = vrot.lane.b32.xlu0 %v600, 126
    %v603 = vpop.permute.xlu0 %602
    %604 = vrot.lane.b32.xlu0 %v601, 126
    %v605 = vpop.permute.xlu0 %604
    %v608 = vsel %vm468, 1.0, %v603
    %v609 = vsel %vm468, 1.0, %v605
    %v610 = vld [vmem:[%s10] sm:$0xff]
    %613 = vset.pattern.permute.xlu0 0
    %614 = vperm.xlu0 %613, %v608
    %v615 = vpop.permute.xlu0 %614
    %616 = vset.pattern.permute.xlu0 0
    %617 = vperm.xlu0 %616, %v609
    %v618 = vpop.permute.xlu0 %617
    %v619 = vlaneseq
    %v620 = vand.u32 %v619, 127
    %v621 = vlaneseq
    %v622 = vshrl.u32 %v621, 7
    %v623 = vsub.s32 %v620, %v622
    %v624 = vrot.slane %v615, %v623
    %v625 = vlaneseq
    %v626 = vshrl.u32 %v625, 7
    %v627 = vsub.s32 %v620, %v626
    %v628 = vrot.slane %v618, %v627
    %vm629 = vcmask 1041409
    %v630 = vsel %vm629, %v628, %v624
    %vm631 = vcmask 64512
    %v632 = vsel %vm631, %v630, 0
    %634 = vmatprep.subr.mxu0 0.0
    %635 = vmatpush1.msra.mxu0 %v610
    %636 = vmatprep.subr.mxu0 0.0
    %637 = vmatpush1.msra.mxu0 0.0
    %638 = vmatprep.subr.mxu0 0.0
    %639 = vmatpush1.msra.mxu0 0.0
    %640 = vmatprep.subr.mxu0 0.0
    %641 = vmatpush1.msra.mxu0 0.0
    %642 = vmatprep.subr.mxu0 0.0
    %643 = vmatpush1.msra.mxu0 0.0
    %644 = vmatprep.subr.mxu0 0.0
    %645 = vmatpush1.msra.mxu0 0.0
    %646 = vmatprep.subr.mxu0 0.0
    %647 = vmatpush1.msra.mxu0 0.0
    %648 = vmatprep.subr.mxu0 0.0
    %649 = vmatpush1.msra.mxu0 0.0
    %650 = vmatprep.subr.mxu0 0.0
    %651 = vmatpush1.msra.mxu0 0.0
    %652 = vmatprep.subr.mxu0 0.0
    %653 = vmatpush1.msra.mxu0 0.0
    %654 = vmatprep.subr.mxu0 0.0
    %655 = vmatpush1.msra.mxu0 0.0
    %656 = vmatprep.subr.mxu0 0.0
    %657 = vmatpush1.msra.mxu0 0.0
    %658 = vmatprep.subr.mxu0 0.0
    %659 = vmatpush1.msra.mxu0 0.0
    %660 = vmatprep.subr.mxu0 0.0
    %661 = vmatpush1.msra.mxu0 0.0
    %662 = vmatprep.subr.mxu0 0.0
    %663 = vmatpush1.msra.mxu0 0.0
    %664 = vmatprep.subr.mxu0 0.0
    %665 = vmatpush1.msra.mxu0 0.0
    %666 = vmatprep.subr.mxu0 0.0
    %667 = vmatpush1.msra.mxu0 0.0
    %668 = vmatprep.subr.mxu0 0.0
    %669 = vmatpush1.msra.mxu0 0.0
    %670 = vmatprep.subr.mxu0 0.0
    %671 = vmatpush1.msra.mxu0 0.0
    %672 = vmatprep.subr.mxu0 0.0
    %673 = vmatpush1.msra.mxu0 0.0
    %674 = vmatprep.subr.mxu0 0.0
    %675 = vmatpush1.msra.mxu0 0.0
    %676 = vmatprep.subr.mxu0 0.0
    %677 = vmatpush1.msra.mxu0 0.0
    %678 = vmatprep.subr.mxu0 0.0
    %679 = vmatpush1.msra.mxu0 0.0
    %680 = vmatprep.subr.mxu0 0.0
    %681 = vmatpush1.msra.mxu0 0.0
    %682 = vmatprep.subr.mxu0 0.0
    %683 = vmatpush1.msra.mxu0 0.0
    %684 = vmatprep.subr.mxu0 0.0
    %685 = vmatpush1.msra.mxu0 0.0
    %686 = vmatprep.subr.mxu0 0.0
    %687 = vmatpush1.msra.mxu0 0.0
    %688 = vmatprep.subr.mxu0 0.0
    %689 = vmatpush1.msra.mxu0 0.0
    %690 = vmatprep.subr.mxu0 0.0
    %691 = vmatpush1.msra.mxu0 0.0
    %692 = vmatprep.subr.mxu0 0.0
    %693 = vmatpush1.msra.mxu0 0.0
    %694 = vmatprep.subr.mxu0 0.0
    %695 = vmatpush1.msra.mxu0 0.0
    %696 = vmatprep.subr.mxu0 0.0
    %697 = vmatpush1.msra.mxu0 0.0
    %698 = vmatprep.mubr.f32.mxu0 0.0
    %699 = vmatmul.mubr.f32.gmra.mrb[0].mxu0 %v632
    %v700 = vpop.f32.mrb[0].mxu0
    %v701 = vadd.f32 0.0, %v700
    %v702 = vpop.f32.mrb[0].mxu0
    %703 = vdwg.mxu0
    %v704 = vlaneseq
    %v705 = vshrl.u32 %v704, 7
    %v706 = vsub.s32 0, %v705
    %v707 = vrot.slane %v701, %v706
    %709 = vbcast.lane.b32.xlu0 %v707, 256
    %v710 = vpop.permute.xlu0 %709
    %v711 = vlaneseq
    %v712 = vshrl.u32 %v711, 7
    %v713 = vsub.s32 1, %v712
    %v714 = vrot.slane %v701, %v713
    %716 = vbcast.lane.b32.xlu0 %v714, 256
    %v717 = vpop.permute.xlu0 %716
    %v720 = vunpack.c.l.s4 1966171168
    %v721 = vunpack.c.0.s8 %v720
    %v722 = vlaneseq
    %v723 = vshrl.u32 %v722, 7
    %v724 = vsub.s32 %v721, %v723
    %v725 = vrot.slane %v701, %v724
    %v726 = vcombine.high %v725, %v725
    %v728 = vunpack.c.l.s4 1966171168
    %v729 = vunpack.c.0.s8 %v728
    %v730 = vlaneseq
    %v731 = vshrl.u32 %v730, 7
    %v732 = vsub.s32 %v729, %v731
    %v733 = vrot.slane %v725, %v732
    %v735 = vunpack.c.l.s4 1966171168
    %v736 = vunpack.c.0.s8 %v735
    %v737 = vlaneseq
    %v738 = vshrl.u32 %v737, 7
    %v739 = vsub.s32 %v736, %v738
    %v740 = vrot.slane %v726, %v739
    %v741 = vlaneseq
    %v742 = vshrl.u32 %v741, 7
    %v743 = vsub.s32 0, %v742
    %v744 = vrot.slane %v733, %v743
    %v745 = vlaneseq
    %v746 = vshrl.u32 %v745, 7
    %v747 = vsub.s32 0, %v746
    %v748 = vrot.slane %v740, %v747
    %vm751 = vcmp.eq.f32.partialorder %v710, %v744
    %vm752 = vcmp.eq.f32.partialorder %v717, %v748
    %v753 = vsel %vm751, 1, 0
    %v754 = vsel %vm752, 1, 0
    %v755 = vcvt.s32.f32 %v753
    %v756 = vcvt.s32.f32 %v754
    %759 = vrot.lane.b32.xlu0 %v460, 96
    %v760 = vpop.permute.xlu0 %759
    %761 = vrot.lane.b32.xlu0 %v461, 96
    %v762 = vpop.permute.xlu0 %761
    %767 = vrot.lane.b32.xlu0 %v755, 99
    %v768 = vpop.permute.xlu0 %767
    %769 = vrot.lane.b32.xlu0 %v756, 99
    %v770 = vpop.permute.xlu0 %769
    %v773 = vsel %vm341, %v568, %v760
    %v774 = vsel %vm341, %v573, %v762
    %vm775 = vcmask 809984
    %v776 = vsel %vm775, %v773, %v768
    %v777 = vsel %vm775, %v774, %v770
    %vm778 = vcmask 875520
    %v779 = vsel %vm778, %v776, 0.0
    %v780 = vsel %vm778, %v777, 0.0
    %781 = vst [vmem:[%s11] sm:$0xff] %v779
    %782 = vst [vmem:[%s11 + $0x8] sm:$0xff] %v780
    // Predicated region
    $region74: #{biaffine_score_layer_forward.1} parent=1 // pred_check
      _
    $region75: #{biaffine_score_layer_forward.1} parent=1 // pred_check_branch
      %784 = sbr.rel (0) target = $region77
    $region76: #{biaffine_score_layer_forward.1} parent=1 // pred_region
      _
    $region77: #{biaffine_score_layer_forward.1} parent=1 // pred_fallthru
      _
    // Predicated region
    $region78: #{biaffine_score_layer_forward.1} parent=1 // pred_check
      _
    $region79: #{biaffine_score_layer_forward.1} parent=1 // pred_check_branch
      %786 = sbr.rel (0) target = $region81
    $region80: #{biaffine_score_layer_forward.1} parent=1 // pred_region
      _
    $region81: #{biaffine_score_layer_forward.1} parent=1 // pred_fallthru
      _
    %787 = vsyncpa [#allocation3], 1
    %788 = vsyncpa [#allocation5], 1
    %789 = vsyncpa [#allocation8], 1
    %790 = vsyncpa [#allocation11], 1

</llo_original>
